<compile_context>
chip_gen: v6e
topology: v6e:2x2x1
jax: 0.10.0
libtpu: 0.0.40
codegen_flags: <defaults>
</compile_context>

<pallas_src>
import jax
import jax.numpy as jnp
from jax.experimental import pallas as pl
from jax.experimental.pallas import tpu as pltpu


# Packed-parameter layout (transposed weights):
#   name -> (weight_row_offset, fan_out, fan_in, bias_column)
# Each weight block W^T has shape (fan_out, fan_in) and starts on an 8-row
# (f32 sublane) boundary inside the slab.
_LAYOUT = {
    "enc1": (0,   64, 3,  0),   # Linear(3, 64)  + ReLU   (Dropout = identity, eval mode)
    "enc2": (64,  32, 64, 1),   # Linear(64, 32) + ReLU   (Dropout = identity)
    "enc3": (96,  16, 32, 2),   # Linear(32, 16) + ReLU
    "emb":  (112, 1,  16, 3),   # Linear(16, 1)            -> scalar embedding (row output)
    "mid":  (120, 16, 16, 4),   # fused Linear(16,1) ∘ Linear(1,16) + ReLU
    "dec2": (136, 32, 16, 5),   # Linear(16, 32) + ReLU    (Dropout = identity)
    "dec3": (168, 64, 32, 6),   # Linear(32, 64) + ReLU    (Dropout = identity)
    "dec4": (232, 3,  64, 7),   # Linear(64, 3)  + Sigmoid
}
_W_ROWS, _W_COLS = 240, 64      # packed transposed-weight slab
_B_ROWS, _N_LAYERS = 64, 8      # packed bias slab: column j = bias of layer j


def _round_up(x, m):
    return ((x + m - 1) // m) * m


def _choose_tile(batch, block_batch):
    """Lane-dense batch tile: multiple of 128, >= 2 grid steps when possible."""
    tb = max(128, _round_up(block_batch, 128))
    if batch > 128:
        # v7x megacore: aim for at least 2 grid steps so ("parallel",) can
        # shard the batch axis across both TensorCores (no-op on v5e/v6e).
        tb = min(tb, _round_up(-(-batch // 2), 128))
    return min(tb, _round_up(batch, 128))


def scalar_embedder_kernel(x_ref, w_ref, b_ref, out_ref):
    """Feature-major (batch-in-lanes) fused forward pass.

    x_ref:   (3, TB)   f32  input tile, batch in the lane dim (TB % 128 == 0)
    w_ref:   (240, 64) f32  packed transposed weights (fout, fin) per layer
    b_ref:   (64, 8)   f32  packed biases, column j = bias of layer j
    out_ref: (4, TB)   f32  rows 0..2 = reconstruction, row 3 = embedding
    """

    def linear(h, name):
        r, fout, fin, bc = _LAYOUT[name]
        w = w_ref[r:r + fout, :fin]          # (fout, fin) static slice, resident
        b = b_ref[:fout, bc:bc + 1]          # (fout, 1) -> broadcast over lanes
        return jnp.dot(w, h, preferred_element_type=jnp.float32) + b

    x = x_ref[...]                           # (3, TB) f32 (already f32, no cast)

    # ----- encoder: 3 -> 64 -> 32 -> 16  (Dropout = identity in eval mode) ---
    h = jnp.maximum(linear(x, "enc1"), 0.0)
    h = jnp.maximum(linear(h, "enc2"), 0.0)
    h = jnp.maximum(linear(h, "enc3"), 0.0)

    # 16 -> 1 embedding head: a single lane-dense (1, TB) row.
    emb = linear(h, "emb")

    # ----- decoder: fused 16 -> 16 bottleneck, then 16 -> 32 -> 64 -> 3 ------
    g = jnp.maximum(linear(h, "mid"), 0.0)             # == relu(emb @ dw1 + db1)
    g = jnp.maximum(linear(g, "dec2"), 0.0)
    g = jnp.maximum(linear(g, "dec3"), 0.0)
    recon = jax.nn.sigmoid(linear(g, "dec4"))          # (3, TB)

    # Direct lane-dense row-slice stores (no concatenate).
    out_ref[0:3, :] = recon
    out_ref[3:4, :] = emb


def pack_params(params):
    """Pack the 16 weight/bias arrays into one transposed f32 weight slab and
    one f32 bias slab. Also fuses the activation-free 16->1->16 bottleneck."""
    w_mid = params["ew4"] @ params["dw1"]                     # (16, 16)
    b_mid = params["eb4"] @ params["dw1"] + params["db1"]     # (1, 16)

    weights = {
        "enc1": params["ew1"], "enc2": params["ew2"], "enc3": params["ew3"],
        "emb": params["ew4"], "mid": w_mid,
        "dec2": params["dw2"], "dec3": params["dw3"], "dec4": params["dw4"],
    }
    biases = {
        "enc1": params["eb1"], "enc2": params["eb2"], "enc3": params["eb3"],
        "emb": params["eb4"], "mid": b_mid,
        "dec2": params["db2"], "dec3": params["db3"], "dec4": params["db4"],
    }

    wpack = jnp.zeros((_W_ROWS, _W_COLS), jnp.float32)
    bpack = jnp.zeros((_B_ROWS, _N_LAYERS), jnp.float32)
    for name, (r, fout, fin, bc) in _LAYOUT.items():
        wpack = wpack.at[r:r + fout, :fin].set(weights[name].T)   # (fout, fin)
        bpack = bpack.at[:fout, bc].set(biases[name][0])
    return wpack, bpack


def scalar_embedder(x, params, *, block_batch=8192):
    """x: [B, 3] float32. Returns (reconstructed [B, 3], scalar_embedding [B, 1])."""
    B = x.shape[0]
    wpack, bpack = pack_params(params)

    tb = _choose_tile(B, block_batch)
    b_pad = _round_up(B, tb)

    # Batch goes to the lane dimension: (B, 3) -> (3, b_pad). Padded columns
    # just run sigmoid(bias chain) and are sliced off below (harmless).
    x_t = jnp.pad(x.astype(jnp.float32).T, ((0, 0), (0, b_pad - B)))

    out = pl.pallas_call(
        scalar_embedder_kernel,
        grid=(b_pad // tb,),
        in_specs=[
            pl.BlockSpec((3, tb), lambda i: (0, i)),                   # batch-tiled input
            pl.BlockSpec((_W_ROWS, _W_COLS), lambda i: (0, 0)),        # weights: resident
            pl.BlockSpec((_B_ROWS, _N_LAYERS), lambda i: (0, 0)),      # biases: resident
        ],
        out_specs=pl.BlockSpec((4, tb), lambda i: (0, i)),             # [recon rows | emb row]
        out_shape=jax.ShapeDtypeStruct((4, b_pad), jnp.float32),
        compiler_params=pltpu.CompilerParams(
            dimension_semantics=("parallel",),        # megacore on v7x
            vmem_limit_bytes=32 * 1024 * 1024,        # covers v5e's 16 MiB default
        ),
    )(x_t, wpack, bpack)

    recon = out[:3, :B].T       # (B, 3)
    emb = out[3:4, :B].T        # (B, 1)
    return recon, emb


def init_params(key):
    """Deterministic synthetic init. Weights stored as (in, out), biases as (1, out)."""
    sizes_enc = [(3, 64), (64, 32), (32, 16), (16, 1)]
    sizes_dec = [(1, 16), (16, 32), (32, 64), (64, 3)]
    params = {}
    names = (
        [("ew%d" % (i + 1), "eb%d" % (i + 1), s) for i, s in enumerate(sizes_enc)]
        + [("dw%d" % (i + 1), "db%d" % (i + 1), s) for i, s in enumerate(sizes_dec)]
    )
    for wname, bname, (fin, fout) in names:
        key, kw, kb = jax.random.split(key, 3)
        bound = 1.0 / jnp.sqrt(fin)  # PyTorch default Linear init range
        params[wname] = jax.random.uniform(
            kw, (fin, fout), jnp.float32, minval=-bound, maxval=bound
        )
        params[bname] = jax.random.uniform(
            kb, (1, fout), jnp.float32, minval=-bound, maxval=bound
        )
    return params


def _reference(x, params):
    """Plain-JAX f32 reference (eval mode: dropout = identity), unfused chain."""
    h = jnp.maximum(x @ params["ew1"] + params["eb1"], 0.0)
    h = jnp.maximum(h @ params["ew2"] + params["eb2"], 0.0)
    h = jnp.maximum(h @ params["ew3"] + params["eb3"], 0.0)
    emb = h @ params["ew4"] + params["eb4"]
    g = jnp.maximum(emb @ params["dw1"] + params["db1"], 0.0)
    g = jnp.maximum(g @ params["dw2"] + params["db2"], 0.0)
    g = jnp.maximum(g @ params["dw3"] + params["db3"], 0.0)
    recon = jax.nn.sigmoid(g @ params["dw4"] + params["db4"])
    return recon, emb


if __name__ == "__main__":
    key = jax.random.PRNGKey(0)
    key, kx = jax.random.split(key)
    B = 8
    x = jax.random.normal(kx, (B, 3), jnp.float32)

    params = init_params(key)

    # f32 activations/weights; only MXU-internal rounding differs from the
    # plain-JAX reference.
    atol = rtol = 2e-2

    # Single-tile case (grid of 1, batch padded up to one 128-lane tile).
    recon, emb = scalar_embedder(x, params)
    jax.block_until_ready((recon, emb))
    recon_ref, emb_ref = _reference(x, params)
    assert recon.shape == (B, 3) and emb.shape == (B, 1)
    assert jnp.allclose(recon, recon_ref, atol=atol, rtol=rtol)
    assert jnp.allclose(emb, emb_ref, atol=atol, rtol=rtol)

    # Multi-step grid + lane-padding path: block_batch=100 is rounded up to a
    # 128-wide tile, B=200 gives a 2-step "parallel" grid (megacore on v7x)
    # plus a padded tail that is sliced off.
    key, kx2 = jax.random.split(key)
    B2 = 200
    x2 = jax.random.normal(kx2, (B2, 3), jnp.float32)
    recon2, emb2 = scalar_embedder(x2, params, block_batch=100)
    jax.block_until_ready((recon2, emb2))
    recon2_ref, emb2_ref = _reference(x2, params)
    assert recon2.shape == (B2, 3) and emb2.shape == (B2, 1)
    assert jnp.allclose(recon2, recon2_ref, atol=atol, rtol=rtol)
    assert jnp.allclose(emb2, emb2_ref, atol=atol, rtol=rtol)

    print("KERNEL_OK")
</pallas_src>

<mosaic_0001>
module attributes {stable_mosaic.version = 11 : i64} {
  func.func @scalar_embedder_kernel(%arg0: i32, %arg1: memref<3x128xf32, #tpu.memory_space<vmem>>, %arg2: memref<240x64xf32, #tpu.memory_space<vmem>>, %arg3: memref<64x8xf32, #tpu.memory_space<vmem>>, %arg4: memref<4x128xf32, #tpu.memory_space<vmem>>) attributes {dimension_semantics = [#tpu.dimension_semantics<parallel>], iteration_bounds = array<i64: 1>, scalar_prefetch = 0 : i64, scratch_operands = 0 : i64, tpu.core_type = #tpu.core_type<tc>, window_params = [{transform_indices = @transform_0, window_bounds = array<i64: 3, 128>}, {pipeline_mode = #tpu.pipeline_mode<synchronous>, transform_indices = @transform_1, window_bounds = array<i64: 240, 64>}, {pipeline_mode = #tpu.pipeline_mode<synchronous>, transform_indices = @transform_2, window_bounds = array<i64: 64, 8>}, {transform_indices = @transform_3, window_bounds = array<i64: 4, 128>}]} {
    %c0 = arith.constant 0 : index
    %c0_0 = arith.constant 0 : index
    %0 = vector.load %arg1[%c0, %c0_0] : memref<3x128xf32, #tpu.memory_space<vmem>>, vector<3x128xf32>
    %c0_1 = arith.constant 0 : index
    %c0_2 = arith.constant 0 : index
    %1 = vector.load %arg2[%c0_1, %c0_2] : memref<240x64xf32, #tpu.memory_space<vmem>>, vector<64x3xf32>
    %c0_3 = arith.constant 0 : index
    %c0_4 = arith.constant 0 : index
    %2 = vector.load %arg3[%c0_3, %c0_4] : memref<64x8xf32, #tpu.memory_space<vmem>>, vector<64x1xf32>
    %cst = arith.constant dense<0.000000e+00> : vector<64x128xf32>
    %3 = tpu.matmul %1, %0, %cst {dimension_numbers = #tpu.dot_dimension_numbers<[1], [0], [0], [1], [0, 0, 1, 1], [], []>} : vector<64x3xf32>, vector<3x128xf32>, vector<64x128xf32> -> vector<64x128xf32>
    %4 = vector.broadcast %2 : vector<64x1xf32> to vector<64x128xf32>
    %5 = arith.addf %3, %4 : vector<64x128xf32>
    %cst_5 = arith.constant 0.000000e+00 : f32
    %6 = vector.broadcast %cst_5 : f32 to vector<64x128xf32>
    %7 = arith.maximumf %5, %6 : vector<64x128xf32>
    %c64 = arith.constant 64 : index
    %c0_6 = arith.constant 0 : index
    %8 = vector.load %arg2[%c64, %c0_6] : memref<240x64xf32, #tpu.memory_space<vmem>>, vector<32x64xf32>
    %c0_7 = arith.constant 0 : index
    %c1 = arith.constant 1 : index
    %9 = vector.load %arg3[%c0_7, %c1] : memref<64x8xf32, #tpu.memory_space<vmem>>, vector<32x1xf32>
    %cst_8 = arith.constant dense<0.000000e+00> : vector<32x128xf32>
    %10 = tpu.matmul %8, %7, %cst_8 {dimension_numbers = #tpu.dot_dimension_numbers<[1], [0], [0], [1], [0, 0, 1, 1], [], []>} : vector<32x64xf32>, vector<64x128xf32>, vector<32x128xf32> -> vector<32x128xf32>
    %11 = vector.broadcast %9 : vector<32x1xf32> to vector<32x128xf32>
    %12 = arith.addf %10, %11 : vector<32x128xf32>
    %cst_9 = arith.constant 0.000000e+00 : f32
    %13 = vector.broadcast %cst_9 : f32 to vector<32x128xf32>
    %14 = arith.maximumf %12, %13 : vector<32x128xf32>
    %c96 = arith.constant 96 : index
    %c0_10 = arith.constant 0 : index
    %15 = vector.load %arg2[%c96, %c0_10] : memref<240x64xf32, #tpu.memory_space<vmem>>, vector<16x32xf32>
    %c0_11 = arith.constant 0 : index
    %c2 = arith.constant 2 : index
    %16 = vector.load %arg3[%c0_11, %c2] : memref<64x8xf32, #tpu.memory_space<vmem>>, vector<16x1xf32>
    %cst_12 = arith.constant dense<0.000000e+00> : vector<16x128xf32>
    %17 = tpu.matmul %15, %14, %cst_12 {dimension_numbers = #tpu.dot_dimension_numbers<[1], [0], [0], [1], [0, 0, 1, 1], [], []>} : vector<16x32xf32>, vector<32x128xf32>, vector<16x128xf32> -> vector<16x128xf32>
    %18 = vector.broadcast %16 : vector<16x1xf32> to vector<16x128xf32>
    %19 = arith.addf %17, %18 : vector<16x128xf32>
    %cst_13 = arith.constant 0.000000e+00 : f32
    %20 = vector.broadcast %cst_13 : f32 to vector<16x128xf32>
    %21 = arith.maximumf %19, %20 : vector<16x128xf32>
    %c112 = arith.constant 112 : index
    %c0_14 = arith.constant 0 : index
    %22 = vector.load %arg2[%c112, %c0_14] : memref<240x64xf32, #tpu.memory_space<vmem>>, vector<1x16xf32>
    %c0_15 = arith.constant 0 : index
    %c3 = arith.constant 3 : index
    %23 = vector.load %arg3[%c0_15, %c3] : memref<64x8xf32, #tpu.memory_space<vmem>>, vector<1x1xf32>
    %cst_16 = arith.constant dense<0.000000e+00> : vector<1x128xf32>
    %24 = tpu.matmul %22, %21, %cst_16 {dimension_numbers = #tpu.dot_dimension_numbers<[1], [0], [0], [1], [0, 0, 1, 1], [], []>} : vector<1x16xf32>, vector<16x128xf32>, vector<1x128xf32> -> vector<1x128xf32>
    %25 = vector.broadcast %23 : vector<1x1xf32> to vector<1x128xf32>
    %26 = arith.addf %24, %25 : vector<1x128xf32>
    %c120 = arith.constant 120 : index
    %c0_17 = arith.constant 0 : index
    %27 = vector.load %arg2[%c120, %c0_17] : memref<240x64xf32, #tpu.memory_space<vmem>>, vector<16x16xf32>
    %c0_18 = arith.constant 0 : index
    %c4 = arith.constant 4 : index
    %28 = vector.load %arg3[%c0_18, %c4] : memref<64x8xf32, #tpu.memory_space<vmem>>, vector<16x1xf32>
    %cst_19 = arith.constant dense<0.000000e+00> : vector<16x128xf32>
    %29 = tpu.matmul %27, %21, %cst_19 {dimension_numbers = #tpu.dot_dimension_numbers<[1], [0], [0], [1], [0, 0, 1, 1], [], []>} : vector<16x16xf32>, vector<16x128xf32>, vector<16x128xf32> -> vector<16x128xf32>
    %30 = vector.broadcast %28 : vector<16x1xf32> to vector<16x128xf32>
    %31 = arith.addf %29, %30 : vector<16x128xf32>
    %cst_20 = arith.constant 0.000000e+00 : f32
    %32 = vector.broadcast %cst_20 : f32 to vector<16x128xf32>
    %33 = arith.maximumf %31, %32 : vector<16x128xf32>
    %c136 = arith.constant 136 : index
    %c0_21 = arith.constant 0 : index
    %34 = vector.load %arg2[%c136, %c0_21] : memref<240x64xf32, #tpu.memory_space<vmem>>, vector<32x16xf32>
    %c0_22 = arith.constant 0 : index
    %c5 = arith.constant 5 : index
    %35 = vector.load %arg3[%c0_22, %c5] : memref<64x8xf32, #tpu.memory_space<vmem>>, vector<32x1xf32>
    %cst_23 = arith.constant dense<0.000000e+00> : vector<32x128xf32>
    %36 = tpu.matmul %34, %33, %cst_23 {dimension_numbers = #tpu.dot_dimension_numbers<[1], [0], [0], [1], [0, 0, 1, 1], [], []>} : vector<32x16xf32>, vector<16x128xf32>, vector<32x128xf32> -> vector<32x128xf32>
    %37 = vector.broadcast %35 : vector<32x1xf32> to vector<32x128xf32>
    %38 = arith.addf %36, %37 : vector<32x128xf32>
    %cst_24 = arith.constant 0.000000e+00 : f32
    %39 = vector.broadcast %cst_24 : f32 to vector<32x128xf32>
    %40 = arith.maximumf %38, %39 : vector<32x128xf32>
    %c168 = arith.constant 168 : index
    %c0_25 = arith.constant 0 : index
    %41 = vector.load %arg2[%c168, %c0_25] : memref<240x64xf32, #tpu.memory_space<vmem>>, vector<64x32xf32>
    %c0_26 = arith.constant 0 : index
    %c6 = arith.constant 6 : index
    %42 = vector.load %arg3[%c0_26, %c6] : memref<64x8xf32, #tpu.memory_space<vmem>>, vector<64x1xf32>
    %cst_27 = arith.constant dense<0.000000e+00> : vector<64x128xf32>
    %43 = tpu.matmul %41, %40, %cst_27 {dimension_numbers = #tpu.dot_dimension_numbers<[1], [0], [0], [1], [0, 0, 1, 1], [], []>} : vector<64x32xf32>, vector<32x128xf32>, vector<64x128xf32> -> vector<64x128xf32>
    %44 = vector.broadcast %42 : vector<64x1xf32> to vector<64x128xf32>
    %45 = arith.addf %43, %44 : vector<64x128xf32>
    %cst_28 = arith.constant 0.000000e+00 : f32
    %46 = vector.broadcast %cst_28 : f32 to vector<64x128xf32>
    %47 = arith.maximumf %45, %46 : vector<64x128xf32>
    %c232 = arith.constant 232 : index
    %c0_29 = arith.constant 0 : index
    %48 = vector.load %arg2[%c232, %c0_29] : memref<240x64xf32, #tpu.memory_space<vmem>>, vector<3x64xf32>
    %c0_30 = arith.constant 0 : index
    %c7 = arith.constant 7 : index
    %49 = vector.load %arg3[%c0_30, %c7] : memref<64x8xf32, #tpu.memory_space<vmem>>, vector<3x1xf32>
    %cst_31 = arith.constant dense<0.000000e+00> : vector<3x128xf32>
    %50 = tpu.matmul %48, %47, %cst_31 {dimension_numbers = #tpu.dot_dimension_numbers<[1], [0], [0], [1], [0, 0, 1, 1], [], []>} : vector<3x64xf32>, vector<64x128xf32>, vector<3x128xf32> -> vector<3x128xf32>
    %51 = vector.broadcast %49 : vector<3x1xf32> to vector<3x128xf32>
    %52 = arith.addf %50, %51 : vector<3x128xf32>
    %53 = arith.negf %52 : vector<3x128xf32>
    %54 = math.exp %53 : vector<3x128xf32>
    %cst_32 = arith.constant 1.000000e+00 : f32
    %55 = vector.broadcast %cst_32 : f32 to vector<3x128xf32>
    %56 = arith.addf %55, %54 : vector<3x128xf32>
    %57 = arith.divf %55, %56 : vector<3x128xf32>
    %c0_33 = arith.constant 0 : index
    %c0_34 = arith.constant 0 : index
    %58 = vector.load %arg4[%c0_33, %c0_34] : memref<4x128xf32, #tpu.memory_space<vmem>>, vector<3x128xf32>
    tpu.vector_store %arg4[%c0_33, %c0_34], %57 {strides = array<i32>} : memref<4x128xf32, #tpu.memory_space<vmem>>, vector<3x128xf32>,
    %c3_35 = arith.constant 3 : index
    %c0_36 = arith.constant 0 : index
    %59 = vector.load %arg4[%c3_35, %c0_36] : memref<4x128xf32, #tpu.memory_space<vmem>>, vector<1x128xf32>
    tpu.vector_store %arg4[%c3_35, %c0_36], %26 {strides = array<i32>} : memref<4x128xf32, #tpu.memory_space<vmem>>, vector<1x128xf32>,
    return
  }
  func.func @transform_0(%arg0: i32) -> (i32, i32) {
    %c0_i32 = arith.constant 0 : i32
    %c0_i32_0 = arith.constant 0 : i32
    return %c0_i32, %arg0 : i32, i32
  }
  func.func @transform_1(%arg0: i32) -> (i32, i32) {
    %c0_i32 = arith.constant 0 : i32
    %c0_i32_0 = arith.constant 0 : i32
    %c0_i32_1 = arith.constant 0 : i32
    return %c0_i32, %c0_i32_0 : i32, i32
  }
  func.func @transform_2(%arg0: i32) -> (i32, i32) {
    %c0_i32 = arith.constant 0 : i32
    %c0_i32_0 = arith.constant 0 : i32
    %c0_i32_1 = arith.constant 0 : i32
    return %c0_i32, %c0_i32_0 : i32, i32
  }
  func.func @transform_3(%arg0: i32) -> (i32, i32) {
    %c0_i32 = arith.constant 0 : i32
    %c0_i32_0 = arith.constant 0 : i32
    return %c0_i32, %arg0 : i32, i32
  }
}

</mosaic_0001>

<llo_original>
// kernel: tpu_custom_call.1
$region0: #{tpu_custom_call.1}
  #allocation0 [shape = 'u32[]', space=smem, size = 0x4, offset = 0x4, fixed_abs, tag = 'smem constant byte address 0x4 - core index']
  #allocation1 [shape = 'u32[144,128]{1,0:T(1,128)}', space=vmem, size = 0x12000, scoped, tag = 'internal scratch']
  %s0 = inlined_call_operand.vmem [shape: f32[3,128], index: 0, kind: input, shape index: {}]
  %s1 = inlined_call_operand.vmem [shape: f32[240,64], index: 1, kind: input, shape index: {}]
  %s2 = inlined_call_operand.vmem [shape: f32[64,8], index: 2, kind: input, shape index: {}]
  %s3 = inlined_call_operand.hbm [shape: f32[4,128], index: 3, kind: output, shape index: {}]
  %s4 = sld [smem:[#allocation0]]
  $region22: #{tpu_custom_call.1} parent=0
    _
  %s6 = ssub.s32 1, %s4
  %s7 = scalar_select 0, %s6, %s4
  $region1: #{tpu_custom_call.1} parent=0
    #allocation2 [shape = 'u8[2048]{0}', space=vmem, size = 0x800, scoped, tag = 'output window, operand 0, single buffered']
    #allocation3 [shape = 's32[1]{0}', space=sflag, size = 0x4, scoped, tag = 'scoped memory for tpu_custom_call.1']
    %8 = vsyncpa [#allocation3], 0
    // Predicated region
    $region2: #{tpu_custom_call.1} parent=1 // pred_check
      _
    $region3: #{tpu_custom_call.1} parent=1 // pred_check_branch
      %10 = sbr.rel (0) target = $region5
    $region4: #{tpu_custom_call.1} parent=1 // pred_region
      _
    $region5: #{tpu_custom_call.1} parent=1 // pred_fallthru
      _
    // Predicated region
    $region6: #{tpu_custom_call.1} parent=1 // pred_check
      _
    $region7: #{tpu_custom_call.1} parent=1 // pred_check_branch
      %12 = sbr.rel (0) target = $region9
    $region8: #{tpu_custom_call.1} parent=1 // pred_region
      _
    $region9: #{tpu_custom_call.1} parent=1 // pred_fallthru
      _
    // Predicated region
    $region10: #{tpu_custom_call.1} parent=1 // pred_check
      _
    $region11: #{tpu_custom_call.1} parent=1 // pred_check_branch
      %14 = sbr.rel (0) target = $region13
    $region12: #{tpu_custom_call.1} parent=1 // pred_region
      _
    $region13: #{tpu_custom_call.1} parent=1 // pred_fallthru
      _
    %v15 = vld [vmem:[%s0] sm:$0x7]
    %v16 = vld [vmem:[%s1] sm:$0xff]
    %v17 = vld [vmem:[%s1 + $0x8] sm:$0xff]
    %v18 = vld [vmem:[%s1 + $0x10] sm:$0xff]
    %v19 = vld [vmem:[%s1 + $0x18] sm:$0xff]
    %v20 = vld [vmem:[%s1 + $0x20] sm:$0xff]
    %v21 = vld [vmem:[%s1 + $0x28] sm:$0xff]
    %v22 = vld [vmem:[%s1 + $0x30] sm:$0xff]
    %v23 = vld [vmem:[%s1 + $0x38] sm:$0xff]
    %v24 = vld [vmem:[%s2] sm:$0xff]
    %v25 = vld [vmem:[%s2 + $0x8] sm:$0xff]
    %v26 = vld [vmem:[%s2 + $0x10] sm:$0xff]
    %v27 = vld [vmem:[%s2 + $0x18] sm:$0xff]
    %v28 = vld [vmem:[%s2 + $0x20] sm:$0xff]
    %v29 = vld [vmem:[%s2 + $0x28] sm:$0xff]
    %v30 = vld [vmem:[%s2 + $0x30] sm:$0xff]
    %v31 = vld [vmem:[%s2 + $0x38] sm:$0xff]
    %33 = vset.pattern.permute.xlu0 0
    %34 = vperm.xlu0 %33, %v24
    %v35 = vpop.permute.xlu0 %34
    %38 = vset.pattern.permute.xlu0 0
    %39 = vperm.xlu0 %38, %v25
    %v40 = vpop.permute.xlu0 %39
    %43 = vset.pattern.permute.xlu0 0
    %44 = vperm.xlu0 %43, %v26
    %v45 = vpop.permute.xlu0 %44
    %48 = vset.pattern.permute.xlu0 0
    %49 = vperm.xlu0 %48, %v27
    %v50 = vpop.permute.xlu0 %49
    %53 = vset.pattern.permute.xlu0 0
    %54 = vperm.xlu0 %53, %v28
    %v55 = vpop.permute.xlu0 %54
    %58 = vset.pattern.permute.xlu0 0
    %59 = vperm.xlu0 %58, %v29
    %v60 = vpop.permute.xlu0 %59
    %63 = vset.pattern.permute.xlu0 0
    %64 = vperm.xlu0 %63, %v30
    %v65 = vpop.permute.xlu0 %64
    %68 = vset.pattern.permute.xlu0 0
    %69 = vperm.xlu0 %68, %v31
    %v70 = vpop.permute.xlu0 %69
    %vm72 = vcmask 23552
    %v74 = vsel %vm72, %v16, 0
    %v77 = vsel %vm72, %v17, 0
    %v80 = vsel %vm72, %v18, 0
    %v83 = vsel %vm72, %v19, 0
    %v86 = vsel %vm72, %v20, 0
    %v89 = vsel %vm72, %v21, 0
    %v92 = vsel %vm72, %v22, 0
    %v95 = vsel %vm72, %v23, 0
    %vm97 = vcmask 1042432
    %v99 = vsel %vm97, %v15, 0
    %101 = vmatprep.subr.mxu0 0.0
    %102 = vmatpush1.msra.mxu0 0.0
    %103 = vmatprep.subr.mxu0 0.0
    %104 = vmatpush1.msra.mxu0 0.0
    %105 = vmatprep.subr.mxu0 0.0
    %106 = vmatpush1.msra.mxu0 0.0
    %107 = vmatprep.subr.mxu0 0.0
    %108 = vmatpush1.msra.mxu0 0.0
    %109 = vmatprep.subr.mxu0 0.0
    %110 = vmatpush1.msra.mxu0 0.0
    %111 = vmatprep.subr.mxu0 0.0
    %112 = vmatpush1.msra.mxu0 0.0
    %113 = vmatprep.subr.mxu0 0.0
    %114 = vmatpush1.msra.mxu0 0.0
    %115 = vmatprep.subr.mxu0 0.0
    %116 = vmatpush1.msra.mxu0 0.0
    %117 = vmatprep.subr.mxu0 0.0
    %118 = vmatpush1.msra.mxu0 0.0
    %119 = vmatprep.subr.mxu0 0.0
    %120 = vmatpush1.msra.mxu0 0.0
    %121 = vmatprep.subr.mxu0 0.0
    %122 = vmatpush1.msra.mxu0 0.0
    %123 = vmatprep.subr.mxu0 0.0
    %124 = vmatpush1.msra.mxu0 0.0
    %125 = vmatprep.subr.mxu0 0.0
    %126 = vmatpush1.msra.mxu0 0.0
    %127 = vmatprep.subr.mxu0 0.0
    %128 = vmatpush1.msra.mxu0 0.0
    %129 = vmatprep.subr.mxu0 0.0
    %130 = vmatpush1.msra.mxu0 0.0
    %131 = vmatprep.subr.mxu0 0.0
    %132 = vmatpush1.msra.mxu0 %v99
    %133 = vmatprep.subr.mxu0 0.0
    %134 = vmatpush2.msra.mxu0 0.0
    %135 = vmatprep.subr.mxu0 0.0
    %136 = vmatpush2.msra.mxu0 0.0
    %137 = vmatprep.subr.mxu0 0.0
    %138 = vmatpush2.msra.mxu0 0.0
    %139 = vmatprep.subr.mxu0 0.0
    %140 = vmatpush2.msra.mxu0 0.0
    %141 = vmatprep.subr.mxu0 0.0
    %142 = vmatpush2.msra.mxu0 0.0
    %143 = vmatprep.subr.mxu0 0.0
    %144 = vmatpush2.msra.mxu0 0.0
    %145 = vmatprep.subr.mxu0 0.0
    %146 = vmatpush2.msra.mxu0 0.0
    %147 = vmatprep.subr.mxu0 0.0
    %148 = vmatpush2.msra.mxu0 0.0
    %149 = vmatprep.subr.mxu0 0.0
    %150 = vmatpush2.msra.mxu0 0.0
    %151 = vmatprep.subr.mxu0 0.0
    %152 = vmatpush2.msra.mxu0 0.0
    %153 = vmatprep.subr.mxu0 0.0
    %154 = vmatpush2.msra.mxu0 0.0
    %155 = vmatprep.subr.mxu0 0.0
    %156 = vmatpush2.msra.mxu0 0.0
    %157 = vmatprep.subr.mxu0 0.0
    %158 = vmatpush2.msra.mxu0 0.0
    %159 = vmatprep.subr.mxu0 0.0
    %160 = vmatpush2.msra.mxu0 0.0
    %161 = vmatprep.subr.mxu0 0.0
    %162 = vmatpush2.msra.mxu0 0.0
    %163 = vmatprep.subr.mxu0 0.0
    %164 = vmatpush2.msra.mxu0 0.0
    %165 = vmatprep.mubr.f32.mxu0 0.0
    %166 = vmatmul.mubr.f32.gmra.mxu0 %v74
    %v167 = vpop.f32.mrf.mxu0
    %v168 = vadd.f32 %v35, %v167
    %v169 = vpop.f32.mrf.mxu0
    %170 = vmatprep.mubr.f32.mxu0 0.0
    %171 = vmatmul.mubr.f32.gmra.mxu0 %v77
    %v172 = vpop.f32.mrf.mxu0
    %v173 = vadd.f32 %v40, %v172
    %v174 = vpop.f32.mrf.mxu0
    %175 = vmatprep.mubr.f32.mxu0 0.0
    %176 = vmatmul.mubr.f32.gmra.mxu0 %v80
    %v177 = vpop.f32.mrf.mxu0
    %v178 = vadd.f32 %v45, %v177
    %v179 = vpop.f32.mrf.mxu0
    %180 = vmatprep.mubr.f32.mxu0 0.0
    %181 = vmatmul.mubr.f32.gmra.mxu0 %v83
    %v182 = vpop.f32.mrf.mxu0
    %v183 = vadd.f32 %v50, %v182
    %v184 = vpop.f32.mrf.mxu0
    %185 = vmatprep.mubr.f32.mxu0 0.0
    %186 = vmatmul.mubr.f32.gmra.mxu0 %v86
    %v187 = vpop.f32.mrf.mxu0
    %v188 = vadd.f32 %v55, %v187
    %v189 = vpop.f32.mrf.mxu0
    %190 = vmatprep.mubr.f32.mxu0 0.0
    %191 = vmatmul.mubr.f32.gmra.mxu0 %v89
    %v192 = vpop.f32.mrf.mxu0
    %v193 = vadd.f32 %v60, %v192
    %v194 = vpop.f32.mrf.mxu0
    %195 = vmatprep.mubr.f32.mxu0 0.0
    %196 = vmatmul.mubr.f32.gmra.mxu0 %v92
    %v197 = vpop.f32.mrf.mxu0
    %v198 = vadd.f32 %v65, %v197
    %v199 = vpop.f32.mrf.mxu0
    %200 = vmatprep.mubr.f32.mxu0 0.0
    %201 = vmatmul.mubr.f32.gmra.mxu0 %v95
    %v202 = vpop.f32.mrf.mxu0
    %v203 = vadd.f32 %v70, %v202
    %v204 = vpop.f32.mrf.mxu0
    %205 = vdwg.mxu0
    %v206 = vmax.f32 %v168, 0.0
    %v207 = vmax.f32 %v173, 0.0
    %v208 = vmax.f32 %v178, 0.0
    %v209 = vmax.f32 %v183, 0.0
    %v210 = vmax.f32 %v188, 0.0
    %v211 = vmax.f32 %v193, 0.0
    %v212 = vmax.f32 %v198, 0.0
    %v213 = vmax.f32 %v203, 0.0
    %v214 = vld [vmem:[%s1 + $0x40] sm:$0xff]
    %v215 = vld [vmem:[%s1 + $0x48] sm:$0xff]
    %v216 = vld [vmem:[%s1 + $0x50] sm:$0xff]
    %v217 = vld [vmem:[%s1 + $0x58] sm:$0xff]
    %v218 = vld [vmem:[%s2] sm:$0xff]
    %v219 = vld [vmem:[%s2 + $0x8] sm:$0xff]
    %v220 = vld [vmem:[%s2 + $0x10] sm:$0xff]
    %v221 = vld [vmem:[%s2 + $0x18] sm:$0xff]
    %223 = vset.pattern.permute.xlu0 1
    %224 = vperm.xlu0 %223, %v218
    %v225 = vpop.permute.xlu0 %224
    %228 = vset.pattern.permute.xlu0 1
    %229 = vperm.xlu0 %228, %v219
    %v230 = vpop.permute.xlu0 %229
    %233 = vset.pattern.permute.xlu0 1
    %234 = vperm.xlu0 %233, %v220
    %v235 = vpop.permute.xlu0 %234
    %238 = vset.pattern.permute.xlu0 1
    %239 = vperm.xlu0 %238, %v221
    %v240 = vpop.permute.xlu0 %239
    %vm242 = vcmask 523264
    %v244 = vsel %vm242, %v214, 0
    %v247 = vsel %vm242, %v215, 0
    %v250 = vsel %vm242, %v216, 0
    %v253 = vsel %vm242, %v217, 0
    %255 = vmatprep.subr.mxu0 0.0
    %256 = vmatpush1.msra.mxu0 0.0
    %257 = vmatprep.subr.mxu0 0.0
    %258 = vmatpush1.msra.mxu0 0.0
    %259 = vmatprep.subr.mxu0 0.0
    %260 = vmatpush1.msra.mxu0 0.0
    %261 = vmatprep.subr.mxu0 0.0
    %262 = vmatpush1.msra.mxu0 0.0
    %263 = vmatprep.subr.mxu0 0.0
    %264 = vmatpush1.msra.mxu0 0.0
    %265 = vmatprep.subr.mxu0 0.0
    %266 = vmatpush1.msra.mxu0 0.0
    %267 = vmatprep.subr.mxu0 0.0
    %268 = vmatpush1.msra.mxu0 0.0
    %269 = vmatprep.subr.mxu0 0.0
    %270 = vmatpush1.msra.mxu0 0.0
    %271 = vmatprep.subr.mxu0 0.0
    %272 = vmatpush1.msra.mxu0 %v213
    %273 = vmatprep.subr.mxu0 0.0
    %274 = vmatpush1.msra.mxu0 %v212
    %275 = vmatprep.subr.mxu0 0.0
    %276 = vmatpush1.msra.mxu0 %v211
    %277 = vmatprep.subr.mxu0 0.0
    %278 = vmatpush1.msra.mxu0 %v210
    %279 = vmatprep.subr.mxu0 0.0
    %280 = vmatpush1.msra.mxu0 %v209
    %281 = vmatprep.subr.mxu0 0.0
    %282 = vmatpush1.msra.mxu0 %v208
    %283 = vmatprep.subr.mxu0 0.0
    %284 = vmatpush1.msra.mxu0 %v207
    %285 = vmatprep.subr.mxu0 0.0
    %286 = vmatpush1.msra.mxu0 %v206
    %287 = vmatprep.subr.mxu0 0.0
    %288 = vmatpush2.msra.mxu0 0.0
    %289 = vmatprep.subr.mxu0 0.0
    %290 = vmatpush2.msra.mxu0 0.0
    %291 = vmatprep.subr.mxu0 0.0
    %292 = vmatpush2.msra.mxu0 0.0
    %293 = vmatprep.subr.mxu0 0.0
    %294 = vmatpush2.msra.mxu0 0.0
    %295 = vmatprep.subr.mxu0 0.0
    %296 = vmatpush2.msra.mxu0 0.0
    %297 = vmatprep.subr.mxu0 0.0
    %298 = vmatpush2.msra.mxu0 0.0
    %299 = vmatprep.subr.mxu0 0.0
    %300 = vmatpush2.msra.mxu0 0.0
    %301 = vmatprep.subr.mxu0 0.0
    %302 = vmatpush2.msra.mxu0 0.0
    %303 = vmatprep.subr.mxu0 0.0
    %304 = vmatpush2.msra.mxu0 0.0
    %305 = vmatprep.subr.mxu0 0.0
    %306 = vmatpush2.msra.mxu0 0.0
    %307 = vmatprep.subr.mxu0 0.0
    %308 = vmatpush2.msra.mxu0 0.0
    %309 = vmatprep.subr.mxu0 0.0
    %310 = vmatpush2.msra.mxu0 0.0
    %311 = vmatprep.subr.mxu0 0.0
    %312 = vmatpush2.msra.mxu0 0.0
    %313 = vmatprep.subr.mxu0 0.0
    %314 = vmatpush2.msra.mxu0 0.0
    %315 = vmatprep.subr.mxu0 0.0
    %316 = vmatpush2.msra.mxu0 0.0
    %317 = vmatprep.subr.mxu0 0.0
    %318 = vmatpush2.msra.mxu0 0.0
    %319 = vmatprep.mubr.f32.mxu0 0.0
    %320 = vmatmul.mubr.f32.gmra.mxu0 %v244
    %v321 = vpop.f32.mrf.mxu0
    %v322 = vadd.f32 %v225, %v321
    %v323 = vpop.f32.mrf.mxu0
    %324 = vmatprep.mubr.f32.mxu0 0.0
    %325 = vmatmul.mubr.f32.gmra.mxu0 %v247
    %v326 = vpop.f32.mrf.mxu0
    %v327 = vadd.f32 %v230, %v326
    %v328 = vpop.f32.mrf.mxu0
    %329 = vmatprep.mubr.f32.mxu0 0.0
    %330 = vmatmul.mubr.f32.gmra.mxu0 %v250
    %v331 = vpop.f32.mrf.mxu0
    %v332 = vadd.f32 %v235, %v331
    %v333 = vpop.f32.mrf.mxu0
    %334 = vmatprep.mubr.f32.mxu0 0.0
    %335 = vmatmul.mubr.f32.gmra.mxu0 %v253
    %v336 = vpop.f32.mrf.mxu0
    %v337 = vadd.f32 %v240, %v336
    %v338 = vpop.f32.mrf.mxu0
    %339 = vdwg.mxu0
    %v340 = vmax.f32 %v322, 0.0
    %v341 = vmax.f32 %v327, 0.0
    %v342 = vmax.f32 %v332, 0.0
    %v343 = vmax.f32 %v337, 0.0
    %v344 = vld [vmem:[%s1 + $0x60] sm:$0xff]
    %v345 = vld [vmem:[%s1 + $0x68] sm:$0xff]
    %v346 = vld [vmem:[%s2] sm:$0xff]
    %v347 = vld [vmem:[%s2 + $0x8] sm:$0xff]
    %349 = vset.pattern.permute.xlu0 2
    %350 = vperm.xlu0 %349, %v346
    %v351 = vpop.permute.xlu0 %350
    %354 = vset.pattern.permute.xlu0 2
    %355 = vperm.xlu0 %354, %v347
    %v356 = vpop.permute.xlu0 %355
    %vm358 = vcmask 261120
    %v360 = vsel %vm358, %v344, 0
    %v363 = vsel %vm358, %v345, 0
    %365 = vmatprep.subr.mxu0 0.0
    %366 = vmatpush1.msra.mxu0 0.0
    %367 = vmatprep.subr.mxu0 0.0
    %368 = vmatpush1.msra.mxu0 0.0
    %369 = vmatprep.subr.mxu0 0.0
    %370 = vmatpush1.msra.mxu0 0.0
    %371 = vmatprep.subr.mxu0 0.0
    %372 = vmatpush1.msra.mxu0 0.0
    %373 = vmatprep.subr.mxu0 0.0
    %374 = vmatpush1.msra.mxu0 0.0
    %375 = vmatprep.subr.mxu0 0.0
    %376 = vmatpush1.msra.mxu0 0.0
    %377 = vmatprep.subr.mxu0 0.0
    %378 = vmatpush1.msra.mxu0 0.0
    %379 = vmatprep.subr.mxu0 0.0
    %380 = vmatpush1.msra.mxu0 0.0
    %381 = vmatprep.subr.mxu0 0.0
    %382 = vmatpush1.msra.mxu0 0.0
    %383 = vmatprep.subr.mxu0 0.0
    %384 = vmatpush1.msra.mxu0 0.0
    %385 = vmatprep.subr.mxu0 0.0
    %386 = vmatpush1.msra.mxu0 0.0
    %387 = vmatprep.subr.mxu0 0.0
    %388 = vmatpush1.msra.mxu0 0.0
    %389 = vmatprep.subr.mxu0 0.0
    %390 = vmatpush1.msra.mxu0 %v343
    %391 = vmatprep.subr.mxu0 0.0
    %392 = vmatpush1.msra.mxu0 %v342
    %393 = vmatprep.subr.mxu0 0.0
    %394 = vmatpush1.msra.mxu0 %v341
    %395 = vmatprep.subr.mxu0 0.0
    %396 = vmatpush1.msra.mxu0 %v340
    %397 = vmatprep.subr.mxu0 0.0
    %398 = vmatpush2.msra.mxu0 0.0
    %399 = vmatprep.subr.mxu0 0.0
    %400 = vmatpush2.msra.mxu0 0.0
    %401 = vmatprep.subr.mxu0 0.0
    %402 = vmatpush2.msra.mxu0 0.0
    %403 = vmatprep.subr.mxu0 0.0
    %404 = vmatpush2.msra.mxu0 0.0
    %405 = vmatprep.subr.mxu0 0.0
    %406 = vmatpush2.msra.mxu0 0.0
    %407 = vmatprep.subr.mxu0 0.0
    %408 = vmatpush2.msra.mxu0 0.0
    %409 = vmatprep.subr.mxu0 0.0
    %410 = vmatpush2.msra.mxu0 0.0
    %411 = vmatprep.subr.mxu0 0.0
    %412 = vmatpush2.msra.mxu0 0.0
    %413 = vmatprep.subr.mxu0 0.0
    %414 = vmatpush2.msra.mxu0 0.0
    %415 = vmatprep.subr.mxu0 0.0
    %416 = vmatpush2.msra.mxu0 0.0
    %417 = vmatprep.subr.mxu0 0.0
    %418 = vmatpush2.msra.mxu0 0.0
    %419 = vmatprep.subr.mxu0 0.0
    %420 = vmatpush2.msra.mxu0 0.0
    %421 = vmatprep.subr.mxu0 0.0
    %422 = vmatpush2.msra.mxu0 0.0
    %423 = vmatprep.subr.mxu0 0.0
    %424 = vmatpush2.msra.mxu0 0.0
    %425 = vmatprep.subr.mxu0 0.0
    %426 = vmatpush2.msra.mxu0 0.0
    %427 = vmatprep.subr.mxu0 0.0
    %428 = vmatpush2.msra.mxu0 0.0
    %429 = vmatprep.mubr.f32.mxu0 0.0
    %430 = vmatmul.mubr.f32.gmra.mxu0 %v360
    %v431 = vpop.f32.mrf.mxu0
    %v432 = vadd.f32 %v351, %v431
    %v433 = vpop.f32.mrf.mxu0
    %434 = vmatprep.mubr.f32.mxu0 0.0
    %435 = vmatmul.mubr.f32.gmra.mxu0 %v363
    %v436 = vpop.f32.mrf.mxu0
    %v437 = vadd.f32 %v356, %v436
    %v438 = vpop.f32.mrf.mxu0
    %439 = vdwg.mxu0
    %v440 = vmax.f32 %v432, 0.0
    %v441 = vmax.f32 %v437, 0.0
    %v442 = vld [vmem:[%s1 + $0x70] sm:$0x1]
    %v443 = vld [vmem:[%s2] sm:$0x1]
    %445 = vset.pattern.permute.xlu0 3
    %446 = vperm.xlu0 %445, %v443
    %v447 = vpop.permute.xlu0 %446
    %vm449 = vcmask 130048
    %v451 = vsel %vm449, %v442, 0
    %453 = vmatprep.subr.mxu0 0.0
    %454 = vmatpush1.msra.mxu0 0.0
    %455 = vmatprep.subr.mxu0 0.0
    %456 = vmatpush1.msra.mxu0 0.0
    %457 = vmatprep.subr.mxu0 0.0
    %458 = vmatpush1.msra.mxu0 0.0
    %459 = vmatprep.subr.mxu0 0.0
    %460 = vmatpush1.msra.mxu0 0.0
    %461 = vmatprep.subr.mxu0 0.0
    %462 = vmatpush1.msra.mxu0 0.0
    %463 = vmatprep.subr.mxu0 0.0
    %464 = vmatpush1.msra.mxu0 0.0
    %465 = vmatprep.subr.mxu0 0.0
    %466 = vmatpush1.msra.mxu0 0.0
    %467 = vmatprep.subr.mxu0 0.0
    %468 = vmatpush1.msra.mxu0 0.0
    %469 = vmatprep.subr.mxu0 0.0
    %470 = vmatpush1.msra.mxu0 0.0
    %471 = vmatprep.subr.mxu0 0.0
    %472 = vmatpush1.msra.mxu0 0.0
    %473 = vmatprep.subr.mxu0 0.0
    %474 = vmatpush1.msra.mxu0 0.0
    %475 = vmatprep.subr.mxu0 0.0
    %476 = vmatpush1.msra.mxu0 0.0
    %477 = vmatprep.subr.mxu0 0.0
    %478 = vmatpush1.msra.mxu0 0.0
    %479 = vmatprep.subr.mxu0 0.0
    %480 = vmatpush1.msra.mxu0 0.0
    %481 = vmatprep.subr.mxu0 0.0
    %482 = vmatpush1.msra.mxu0 %v441
    %483 = vmatprep.subr.mxu0 0.0
    %484 = vmatpush1.msra.mxu0 %v440
    %485 = vmatprep.subr.mxu0 0.0
    %486 = vmatpush2.msra.mxu0 0.0
    %487 = vmatprep.subr.mxu0 0.0
    %488 = vmatpush2.msra.mxu0 0.0
    %489 = vmatprep.subr.mxu0 0.0
    %490 = vmatpush2.msra.mxu0 0.0
    %491 = vmatprep.subr.mxu0 0.0
    %492 = vmatpush2.msra.mxu0 0.0
    %493 = vmatprep.subr.mxu0 0.0
    %494 = vmatpush2.msra.mxu0 0.0
    %495 = vmatprep.subr.mxu0 0.0
    %496 = vmatpush2.msra.mxu0 0.0
    %497 = vmatprep.subr.mxu0 0.0
    %498 = vmatpush2.msra.mxu0 0.0
    %499 = vmatprep.subr.mxu0 0.0
    %500 = vmatpush2.msra.mxu0 0.0
    %501 = vmatprep.subr.mxu0 0.0
    %502 = vmatpush2.msra.mxu0 0.0
    %503 = vmatprep.subr.mxu0 0.0
    %504 = vmatpush2.msra.mxu0 0.0
    %505 = vmatprep.subr.mxu0 0.0
    %506 = vmatpush2.msra.mxu0 0.0
    %507 = vmatprep.subr.mxu0 0.0
    %508 = vmatpush2.msra.mxu0 0.0
    %509 = vmatprep.subr.mxu0 0.0
    %510 = vmatpush2.msra.mxu0 0.0
    %511 = vmatprep.subr.mxu0 0.0
    %512 = vmatpush2.msra.mxu0 0.0
    %513 = vmatprep.subr.mxu0 0.0
    %514 = vmatpush2.msra.mxu0 0.0
    %515 = vmatprep.subr.mxu0 0.0
    %516 = vmatpush2.msra.mxu0 0.0
    %517 = vmatprep.mubr.f32.mxu0 0.0
    %518 = vmatmul.mubr.f32.gmra.mxu0 %v451
    %v519 = vpop.f32.mrf.mxu0
    %v520 = vadd.f32 %v447, %v519
    %v521 = vpop.f32.mrf.mxu0
    %522 = vdwg.mxu0
    %v523 = vld [vmem:[%s1 + $0x78] sm:$0xff]
    %v524 = vld [vmem:[%s1 + $0x80] sm:$0xff]
    %525 = vset.pattern.permute.xlu0 4
    %526 = vperm.xlu0 %525, %v346
    %v527 = vpop.permute.xlu0 %526
    %529 = vset.pattern.permute.xlu0 4
    %530 = vperm.xlu0 %529, %v347
    %v531 = vpop.permute.xlu0 %530
    %v534 = vsel %vm449, %v523, 0
    %v537 = vsel %vm449, %v524, 0
    %539 = vmatprep.subr.mxu0 0.0
    %540 = vmatpush1.msra.mxu0 0.0
    %541 = vmatprep.subr.mxu0 0.0
    %542 = vmatpush1.msra.mxu0 0.0
    %543 = vmatprep.subr.mxu0 0.0
    %544 = vmatpush1.msra.mxu0 0.0
    %545 = vmatprep.subr.mxu0 0.0
    %546 = vmatpush1.msra.mxu0 0.0
    %547 = vmatprep.subr.mxu0 0.0
    %548 = vmatpush1.msra.mxu0 0.0
    %549 = vmatprep.subr.mxu0 0.0
    %550 = vmatpush1.msra.mxu0 0.0
    %551 = vmatprep.subr.mxu0 0.0
    %552 = vmatpush1.msra.mxu0 0.0
    %553 = vmatprep.subr.mxu0 0.0
    %554 = vmatpush1.msra.mxu0 0.0
    %555 = vmatprep.subr.mxu0 0.0
    %556 = vmatpush1.msra.mxu0 0.0
    %557 = vmatprep.subr.mxu0 0.0
    %558 = vmatpush1.msra.mxu0 0.0
    %559 = vmatprep.subr.mxu0 0.0
    %560 = vmatpush1.msra.mxu0 0.0
    %561 = vmatprep.subr.mxu0 0.0
    %562 = vmatpush1.msra.mxu0 0.0
    %563 = vmatprep.subr.mxu0 0.0
    %564 = vmatpush1.msra.mxu0 0.0
    %565 = vmatprep.subr.mxu0 0.0
    %566 = vmatpush1.msra.mxu0 0.0
    %567 = vmatprep.subr.mxu0 0.0
    %568 = vmatpush1.msra.mxu0 %v441
    %569 = vmatprep.subr.mxu0 0.0
    %570 = vmatpush1.msra.mxu0 %v440
    %571 = vmatprep.subr.mxu0 0.0
    %572 = vmatpush2.msra.mxu0 0.0
    %573 = vmatprep.subr.mxu0 0.0
    %574 = vmatpush2.msra.mxu0 0.0
    %575 = vmatprep.subr.mxu0 0.0
    %576 = vmatpush2.msra.mxu0 0.0
    %577 = vmatprep.subr.mxu0 0.0
    %578 = vmatpush2.msra.mxu0 0.0
    %579 = vmatprep.subr.mxu0 0.0
    %580 = vmatpush2.msra.mxu0 0.0
    %581 = vmatprep.subr.mxu0 0.0
    %582 = vmatpush2.msra.mxu0 0.0
    %583 = vmatprep.subr.mxu0 0.0
    %584 = vmatpush2.msra.mxu0 0.0
    %585 = vmatprep.subr.mxu0 0.0
    %586 = vmatpush2.msra.mxu0 0.0
    %587 = vmatprep.subr.mxu0 0.0
    %588 = vmatpush2.msra.mxu0 0.0
    %589 = vmatprep.subr.mxu0 0.0
    %590 = vmatpush2.msra.mxu0 0.0
    %591 = vmatprep.subr.mxu0 0.0
    %592 = vmatpush2.msra.mxu0 0.0
    %593 = vmatprep.subr.mxu0 0.0
    %594 = vmatpush2.msra.mxu0 0.0
    %595 = vmatprep.subr.mxu0 0.0
    %596 = vmatpush2.msra.mxu0 0.0
    %597 = vmatprep.subr.mxu0 0.0
    %598 = vmatpush2.msra.mxu0 0.0
    %599 = vmatprep.subr.mxu0 0.0
    %600 = vmatpush2.msra.mxu0 0.0
    %601 = vmatprep.subr.mxu0 0.0
    %602 = vmatpush2.msra.mxu0 0.0
    %603 = vmatprep.mubr.f32.mxu0 0.0
    %604 = vmatmul.mubr.f32.gmra.mxu0 %v534
    %v605 = vpop.f32.mrf.mxu0
    %v606 = vadd.f32 %v527, %v605
    %v607 = vpop.f32.mrf.mxu0
    %608 = vmatprep.mubr.f32.mxu0 0.0
    %609 = vmatmul.mubr.f32.gmra.mxu0 %v537
    %v610 = vpop.f32.mrf.mxu0
    %v611 = vadd.f32 %v531, %v610
    %v612 = vpop.f32.mrf.mxu0
    %613 = vdwg.mxu0
    %v614 = vmax.f32 %v606, 0.0
    %v615 = vmax.f32 %v611, 0.0
    %v616 = vld [vmem:[%s1 + $0x88] sm:$0xff]
    %v617 = vld [vmem:[%s1 + $0x90] sm:$0xff]
    %v618 = vld [vmem:[%s1 + $0x98] sm:$0xff]
    %v619 = vld [vmem:[%s1 + $0xa0] sm:$0xff]
    %620 = vset.pattern.permute.xlu0 5
    %621 = vperm.xlu0 %620, %v218
    %v622 = vpop.permute.xlu0 %621
    %624 = vset.pattern.permute.xlu0 5
    %625 = vperm.xlu0 %624, %v219
    %v626 = vpop.permute.xlu0 %625
    %628 = vset.pattern.permute.xlu0 5
    %629 = vperm.xlu0 %628, %v220
    %v630 = vpop.permute.xlu0 %629
    %632 = vset.pattern.permute.xlu0 5
    %633 = vperm.xlu0 %632, %v221
    %v634 = vpop.permute.xlu0 %633
    %v637 = vsel %vm449, %v616, 0
    %v640 = vsel %vm449, %v617, 0
    %v643 = vsel %vm449, %v618, 0
    %v646 = vsel %vm449, %v619, 0
    %648 = vmatprep.subr.mxu0 0.0
    %649 = vmatpush1.msra.mxu0 0.0
    %650 = vmatprep.subr.mxu0 0.0
    %651 = vmatpush1.msra.mxu0 0.0
    %652 = vmatprep.subr.mxu0 0.0
    %653 = vmatpush1.msra.mxu0 0.0
    %654 = vmatprep.subr.mxu0 0.0
    %655 = vmatpush1.msra.mxu0 0.0
    %656 = vmatprep.subr.mxu0 0.0
    %657 = vmatpush1.msra.mxu0 0.0
    %658 = vmatprep.subr.mxu0 0.0
    %659 = vmatpush1.msra.mxu0 0.0
    %660 = vmatprep.subr.mxu0 0.0
    %661 = vmatpush1.msra.mxu0 0.0
    %662 = vmatprep.subr.mxu0 0.0
    %663 = vmatpush1.msra.mxu0 0.0
    %664 = vmatprep.subr.mxu0 0.0
    %665 = vmatpush1.msra.mxu0 0.0
    %666 = vmatprep.subr.mxu0 0.0
    %667 = vmatpush1.msra.mxu0 0.0
    %668 = vmatprep.subr.mxu0 0.0
    %669 = vmatpush1.msra.mxu0 0.0
    %670 = vmatprep.subr.mxu0 0.0
    %671 = vmatpush1.msra.mxu0 0.0
    %672 = vmatprep.subr.mxu0 0.0
    %673 = vmatpush1.msra.mxu0 0.0
    %674 = vmatprep.subr.mxu0 0.0
    %675 = vmatpush1.msra.mxu0 0.0
    %676 = vmatprep.subr.mxu0 0.0
    %677 = vmatpush1.msra.mxu0 %v615
    %678 = vmatprep.subr.mxu0 0.0
    %679 = vmatpush1.msra.mxu0 %v614
    %680 = vmatprep.subr.mxu0 0.0
    %681 = vmatpush2.msra.mxu0 0.0
    %682 = vmatprep.subr.mxu0 0.0
    %683 = vmatpush2.msra.mxu0 0.0
    %684 = vmatprep.subr.mxu0 0.0
    %685 = vmatpush2.msra.mxu0 0.0
    %686 = vmatprep.subr.mxu0 0.0
    %687 = vmatpush2.msra.mxu0 0.0
    %688 = vmatprep.subr.mxu0 0.0
    %689 = vmatpush2.msra.mxu0 0.0
    %690 = vmatprep.subr.mxu0 0.0
    %691 = vmatpush2.msra.mxu0 0.0
    %692 = vmatprep.subr.mxu0 0.0
    %693 = vmatpush2.msra.mxu0 0.0
    %694 = vmatprep.subr.mxu0 0.0
    %695 = vmatpush2.msra.mxu0 0.0
    %696 = vmatprep.subr.mxu0 0.0
    %697 = vmatpush2.msra.mxu0 0.0
    %698 = vmatprep.subr.mxu0 0.0
    %699 = vmatpush2.msra.mxu0 0.0
    %700 = vmatprep.subr.mxu0 0.0
    %701 = vmatpush2.msra.mxu0 0.0
    %702 = vmatprep.subr.mxu0 0.0
    %703 = vmatpush2.msra.mxu0 0.0
    %704 = vmatprep.subr.mxu0 0.0
    %705 = vmatpush2.msra.mxu0 0.0
    %706 = vmatprep.subr.mxu0 0.0
    %707 = vmatpush2.msra.mxu0 0.0
    %708 = vmatprep.subr.mxu0 0.0
    %709 = vmatpush2.msra.mxu0 0.0
    %710 = vmatprep.subr.mxu0 0.0
    %711 = vmatpush2.msra.mxu0 0.0
    %712 = vmatprep.mubr.f32.mxu0 0.0
    %713 = vmatmul.mubr.f32.gmra.mxu0 %v637
    %v714 = vpop.f32.mrf.mxu0
    %v715 = vadd.f32 %v622, %v714
    %v716 = vpop.f32.mrf.mxu0
    %717 = vmatprep.mubr.f32.mxu0 0.0
    %718 = vmatmul.mubr.f32.gmra.mxu0 %v640
    %v719 = vpop.f32.mrf.mxu0
    %v720 = vadd.f32 %v626, %v719
    %v721 = vpop.f32.mrf.mxu0
    %722 = vmatprep.mubr.f32.mxu0 0.0
    %723 = vmatmul.mubr.f32.gmra.mxu0 %v643
    %v724 = vpop.f32.mrf.mxu0
    %v725 = vadd.f32 %v630, %v724
    %v726 = vpop.f32.mrf.mxu0
    %727 = vmatprep.mubr.f32.mxu0 0.0
    %728 = vmatmul.mubr.f32.gmra.mxu0 %v646
    %v729 = vpop.f32.mrf.mxu0
    %v730 = vadd.f32 %v634, %v729
    %v731 = vpop.f32.mrf.mxu0
    %732 = vdwg.mxu0
    %v733 = vmax.f32 %v715, 0.0
    %v734 = vmax.f32 %v720, 0.0
    %v735 = vmax.f32 %v725, 0.0
    %v736 = vmax.f32 %v730, 0.0
    %v737 = vld [vmem:[%s1 + $0xa8] sm:$0xff]
    %v738 = vld [vmem:[%s1 + $0xb0] sm:$0xff]
    %v739 = vld [vmem:[%s1 + $0xb8] sm:$0xff]
    %v740 = vld [vmem:[%s1 + $0xc0] sm:$0xff]
    %v741 = vld [vmem:[%s1 + $0xc8] sm:$0xff]
    %v742 = vld [vmem:[%s1 + $0xd0] sm:$0xff]
    %v743 = vld [vmem:[%s1 + $0xd8] sm:$0xff]
    %v744 = vld [vmem:[%s1 + $0xe0] sm:$0xff]
    %745 = vset.pattern.permute.xlu0 6
    %746 = vperm.xlu0 %745, %v24
    %v747 = vpop.permute.xlu0 %746
    %749 = vset.pattern.permute.xlu0 6
    %750 = vperm.xlu0 %749, %v25
    %v751 = vpop.permute.xlu0 %750
    %753 = vset.pattern.permute.xlu0 6
    %754 = vperm.xlu0 %753, %v26
    %v755 = vpop.permute.xlu0 %754
    %757 = vset.pattern.permute.xlu0 6
    %758 = vperm.xlu0 %757, %v27
    %v759 = vpop.permute.xlu0 %758
    %761 = vset.pattern.permute.xlu0 6
    %762 = vperm.xlu0 %761, %v28
    %v763 = vpop.permute.xlu0 %762
    %765 = vset.pattern.permute.xlu0 6
    %766 = vperm.xlu0 %765, %v29
    %v767 = vpop.permute.xlu0 %766
    %769 = vset.pattern.permute.xlu0 6
    %770 = vperm.xlu0 %769, %v30
    %v771 = vpop.permute.xlu0 %770
    %773 = vset.pattern.permute.xlu0 6
    %774 = vperm.xlu0 %773, %v31
    %v775 = vpop.permute.xlu0 %774
    %v778 = vsel %vm358, %v737, 0
    %v781 = vsel %vm358, %v738, 0
    %v784 = vsel %vm358, %v739, 0
    %v787 = vsel %vm358, %v740, 0
    %v790 = vsel %vm358, %v741, 0
    %v793 = vsel %vm358, %v742, 0
    %v796 = vsel %vm358, %v743, 0
    %v799 = vsel %vm358, %v744, 0
    %801 = vmatprep.subr.mxu0 0.0
    %802 = vmatpush1.msra.mxu0 0.0
    %803 = vmatprep.subr.mxu0 0.0
    %804 = vmatpush1.msra.mxu0 0.0
    %805 = vmatprep.subr.mxu0 0.0
    %806 = vmatpush1.msra.mxu0 0.0
    %807 = vmatprep.subr.mxu0 0.0
    %808 = vmatpush1.msra.mxu0 0.0
    %809 = vmatprep.subr.mxu0 0.0
    %810 = vmatpush1.msra.mxu0 0.0
    %811 = vmatprep.subr.mxu0 0.0
    %812 = vmatpush1.msra.mxu0 0.0
    %813 = vmatprep.subr.mxu0 0.0
    %814 = vmatpush1.msra.mxu0 0.0
    %815 = vmatprep.subr.mxu0 0.0
    %816 = vmatpush1.msra.mxu0 0.0
    %817 = vmatprep.subr.mxu0 0.0
    %818 = vmatpush1.msra.mxu0 0.0
    %819 = vmatprep.subr.mxu0 0.0
    %820 = vmatpush1.msra.mxu0 0.0
    %821 = vmatprep.subr.mxu0 0.0
    %822 = vmatpush1.msra.mxu0 0.0
    %823 = vmatprep.subr.mxu0 0.0
    %824 = vmatpush1.msra.mxu0 0.0
    %825 = vmatprep.subr.mxu0 0.0
    %826 = vmatpush1.msra.mxu0 %v736
    %827 = vmatprep.subr.mxu0 0.0
    %828 = vmatpush1.msra.mxu0 %v735
    %829 = vmatprep.subr.mxu0 0.0
    %830 = vmatpush1.msra.mxu0 %v734
    %831 = vmatprep.subr.mxu0 0.0
    %832 = vmatpush1.msra.mxu0 %v733
    %833 = vmatprep.subr.mxu0 0.0
    %834 = vmatpush2.msra.mxu0 0.0
    %835 = vmatprep.subr.mxu0 0.0
    %836 = vmatpush2.msra.mxu0 0.0
    %837 = vmatprep.subr.mxu0 0.0
    %838 = vmatpush2.msra.mxu0 0.0
    %839 = vmatprep.subr.mxu0 0.0
    %840 = vmatpush2.msra.mxu0 0.0
    %841 = vmatprep.subr.mxu0 0.0
    %842 = vmatpush2.msra.mxu0 0.0
    %843 = vmatprep.subr.mxu0 0.0
    %844 = vmatpush2.msra.mxu0 0.0
    %845 = vmatprep.subr.mxu0 0.0
    %846 = vmatpush2.msra.mxu0 0.0
    %847 = vmatprep.subr.mxu0 0.0
    %848 = vmatpush2.msra.mxu0 0.0
    %849 = vmatprep.subr.mxu0 0.0
    %850 = vmatpush2.msra.mxu0 0.0
    %851 = vmatprep.subr.mxu0 0.0
    %852 = vmatpush2.msra.mxu0 0.0
    %853 = vmatprep.subr.mxu0 0.0
    %854 = vmatpush2.msra.mxu0 0.0
    %855 = vmatprep.subr.mxu0 0.0
    %856 = vmatpush2.msra.mxu0 0.0
    %857 = vmatprep.subr.mxu0 0.0
    %858 = vmatpush2.msra.mxu0 0.0
    %859 = vmatprep.subr.mxu0 0.0
    %860 = vmatpush2.msra.mxu0 0.0
    %861 = vmatprep.subr.mxu0 0.0
    %862 = vmatpush2.msra.mxu0 0.0
    %863 = vmatprep.subr.mxu0 0.0
    %864 = vmatpush2.msra.mxu0 0.0
    %865 = vmatprep.mubr.f32.mxu0 0.0
    %866 = vmatmul.mubr.f32.gmra.mxu0 %v778
    %v867 = vpop.f32.mrf.mxu0
    %v868 = vadd.f32 %v747, %v867
    %v869 = vpop.f32.mrf.mxu0
    %870 = vmatprep.mubr.f32.mxu0 0.0
    %871 = vmatmul.mubr.f32.gmra.mxu0 %v781
    %v872 = vpop.f32.mrf.mxu0
    %v873 = vadd.f32 %v751, %v872
    %v874 = vpop.f32.mrf.mxu0
    %875 = vmatprep.mubr.f32.mxu0 0.0
    %876 = vmatmul.mubr.f32.gmra.mxu0 %v784
    %v877 = vpop.f32.mrf.mxu0
    %v878 = vadd.f32 %v755, %v877
    %v879 = vpop.f32.mrf.mxu0
    %880 = vmatprep.mubr.f32.mxu0 0.0
    %881 = vmatmul.mubr.f32.gmra.mxu0 %v787
    %v882 = vpop.f32.mrf.mxu0
    %v883 = vadd.f32 %v759, %v882
    %v884 = vpop.f32.mrf.mxu0
    %885 = vmatprep.mubr.f32.mxu0 0.0
    %886 = vmatmul.mubr.f32.gmra.mxu0 %v790
    %v887 = vpop.f32.mrf.mxu0
    %v888 = vadd.f32 %v763, %v887
    %v889 = vpop.f32.mrf.mxu0
    %890 = vmatprep.mubr.f32.mxu0 0.0
    %891 = vmatmul.mubr.f32.gmra.mxu0 %v793
    %v892 = vpop.f32.mrf.mxu0
    %v893 = vadd.f32 %v767, %v892
    %v894 = vpop.f32.mrf.mxu0
    %895 = vmatprep.mubr.f32.mxu0 0.0
    %896 = vmatmul.mubr.f32.gmra.mxu0 %v796
    %v897 = vpop.f32.mrf.mxu0
    %v898 = vadd.f32 %v771, %v897
    %v899 = vpop.f32.mrf.mxu0
    %900 = vmatprep.mubr.f32.mxu0 0.0
    %901 = vmatmul.mubr.f32.gmra.mxu0 %v799
    %v902 = vpop.f32.mrf.mxu0
    %v903 = vadd.f32 %v775, %v902
    %v904 = vpop.f32.mrf.mxu0
    %905 = vdwg.mxu0
    %v906 = vmax.f32 %v868, 0.0
    %v907 = vmax.f32 %v873, 0.0
    %v908 = vmax.f32 %v878, 0.0
    %v909 = vmax.f32 %v883, 0.0
    %v910 = vmax.f32 %v888, 0.0
    %v911 = vmax.f32 %v893, 0.0
    %v912 = vmax.f32 %v898, 0.0
    %v913 = vmax.f32 %v903, 0.0
    %v914 = vld [vmem:[%s1 + $0xe8] sm:$0x7]
    %v915 = vld [vmem:[%s2] sm:$0x7]
    %917 = vset.pattern.permute.xlu0 7
    %918 = vperm.xlu0 %917, %v915
    %v919 = vpop.permute.xlu0 %918
    %v922 = vsel %vm242, %v914, 0
    %924 = vmatprep.subr.mxu0 0.0
    %925 = vmatpush1.msra.mxu0 0.0
    %926 = vmatprep.subr.mxu0 0.0
    %927 = vmatpush1.msra.mxu0 0.0
    %928 = vmatprep.subr.mxu0 0.0
    %929 = vmatpush1.msra.mxu0 0.0
    %930 = vmatprep.subr.mxu0 0.0
    %931 = vmatpush1.msra.mxu0 0.0
    %932 = vmatprep.subr.mxu0 0.0
    %933 = vmatpush1.msra.mxu0 0.0
    %934 = vmatprep.subr.mxu0 0.0
    %935 = vmatpush1.msra.mxu0 0.0
    %936 = vmatprep.subr.mxu0 0.0
    %937 = vmatpush1.msra.mxu0 0.0
    %938 = vmatprep.subr.mxu0 0.0
    %939 = vmatpush1.msra.mxu0 0.0
    %940 = vmatprep.subr.mxu0 0.0
    %941 = vmatpush1.msra.mxu0 %v913
    %942 = vmatprep.subr.mxu0 0.0
    %943 = vmatpush1.msra.mxu0 %v912
    %944 = vmatprep.subr.mxu0 0.0
    %945 = vmatpush1.msra.mxu0 %v911
    %946 = vmatprep.subr.mxu0 0.0
    %947 = vmatpush1.msra.mxu0 %v910
    %948 = vmatprep.subr.mxu0 0.0
    %949 = vmatpush1.msra.mxu0 %v909
    %950 = vmatprep.subr.mxu0 0.0
    %951 = vmatpush1.msra.mxu0 %v908
    %952 = vmatprep.subr.mxu0 0.0
    %953 = vmatpush1.msra.mxu0 %v907
    %954 = vmatprep.subr.mxu0 0.0
    %955 = vmatpush1.msra.mxu0 %v906
    %956 = vmatprep.subr.mxu0 0.0
    %957 = vmatpush2.msra.mxu0 0.0
    %958 = vmatprep.subr.mxu0 0.0
    %959 = vmatpush2.msra.mxu0 0.0
    %960 = vmatprep.subr.mxu0 0.0
    %961 = vmatpush2.msra.mxu0 0.0
    %962 = vmatprep.subr.mxu0 0.0
    %963 = vmatpush2.msra.mxu0 0.0
    %964 = vmatprep.subr.mxu0 0.0
    %965 = vmatpush2.msra.mxu0 0.0
    %966 = vmatprep.subr.mxu0 0.0
    %967 = vmatpush2.msra.mxu0 0.0
    %968 = vmatprep.subr.mxu0 0.0
    %969 = vmatpush2.msra.mxu0 0.0
    %970 = vmatprep.subr.mxu0 0.0
    %971 = vmatpush2.msra.mxu0 0.0
    %972 = vmatprep.subr.mxu0 0.0
    %973 = vmatpush2.msra.mxu0 0.0
    %974 = vmatprep.subr.mxu0 0.0
    %975 = vmatpush2.msra.mxu0 0.0
    %976 = vmatprep.subr.mxu0 0.0
    %977 = vmatpush2.msra.mxu0 0.0
    %978 = vmatprep.subr.mxu0 0.0
    %979 = vmatpush2.msra.mxu0 0.0
    %980 = vmatprep.subr.mxu0 0.0
    %981 = vmatpush2.msra.mxu0 0.0
    %982 = vmatprep.subr.mxu0 0.0
    %983 = vmatpush2.msra.mxu0 0.0
    %984 = vmatprep.subr.mxu0 0.0
    %985 = vmatpush2.msra.mxu0 0.0
    %986 = vmatprep.subr.mxu0 0.0
    %987 = vmatpush2.msra.mxu0 0.0
    %988 = vmatprep.mubr.f32.mxu0 0.0
    %989 = vmatmul.mubr.f32.gmra.mxu0 %v922
    %v990 = vpop.f32.mrf.mxu0
    %v991 = vadd.f32 %v919, %v990
    %v992 = vpop.f32.mrf.mxu0
    %993 = vdwg.mxu0
    %v994 = vxor.u32 %v991, 2147483648
    %v995 = vmul.f32 %v994, 1.442695
    %v996 = vpow.pop %v995
    %v997 = vadd.f32 %v996, 1.0
    %v998 = vrcp.pop %v997
    %v999 = vmul.f32 1.0, %v998
    %1000 = vst [vmem:[#allocation2] sm:$0x7] %v999
    %1001 = vst [vmem:[#allocation2 + $0x3] sm:$0x1] %v520
    // Predicated region
    $region14: #{tpu_custom_call.1} parent=1 // pred_check
      _
    $region15: #{tpu_custom_call.1} parent=1 // pred_check_branch
      %1003 = sbr.rel (0) target = $region17
    $region16: #{tpu_custom_call.1} parent=1 // pred_region
      %s1005 = ssub.s32 64, 64
      %1006 = vsyncadd [#allocation3], %s1005
      %s1008 = sshll.u32 [#allocation2], 4
      %s1009 = int_to_ptr.vmem [resolvable:$true] %s1008
      %1011 = dma.vmem_to_hbm [thread:$0]  %s1009, 64, %s3, [#allocation3]
    $region17: #{tpu_custom_call.1} parent=1 // pred_fallthru
      _
    // Predicated region
    $region18: #{tpu_custom_call.1} parent=1 // pred_check
      _
    $region19: #{tpu_custom_call.1} parent=1 // pred_check_branch
      %1013 = sbr.rel (0) target = $region21
    $region20: #{tpu_custom_call.1} parent=1 // pred_region
      %1014 = dma.done [#allocation3], 64
    $region21: #{tpu_custom_call.1} parent=1 // pred_fallthru
      _
    %1015 = vsyncpa [#allocation3], 1

</llo_original>
